<compile_context>
chip_gen: v5e
topology: v5e:2x2
jax: 0.10.0
libtpu: 0.0.40
codegen_flags: <defaults>
</compile_context>

<pallas_src>
import functools

import jax
import jax.numpy as jnp
from jax.experimental import pallas as pl
from jax.experimental.pallas import tpu as pltpu


def _invariant_attention_kernel(h_ref, bias_ref, gamma_ref, wqkv_ref, wout_ref, o_ref,
                                *, heads, dim_head, eps):
    # h_ref    : (TB, N, D)
    # bias_ref : (TB, 1, N) f32   additive key-mask bias (0 keep / -1e30 masked)
    # gamma_ref: (1, D)     f32
    # wqkv_ref : (D, 3*inner) bf16   original column layout; q columns pre-scaled by dh**-0.5
    # wout_ref : (inner, D)   bf16   original layout
    # o_ref    : (TB, N, D)
    tb, n, d_model = h_ref.shape
    inner = heads * dim_head
    tbn = tb * n

    # ---- RMSNorm (f32) ----
    x = h_ref[...].astype(jnp.float32)                        # (TB, N, D)
    gamma = gamma_ref[0].astype(jnp.float32)                   # (D,)
    ms = jnp.mean(x * x, axis=-1, keepdims=True)               # (TB, N, 1)
    xn = x * jax.lax.rsqrt(ms + eps) * gamma[None, None, :]    # (TB, N, D)
    xn2 = xn.reshape(tbn, d_model).astype(jnp.bfloat16)        # (TB*N, D) bf16

    # ---- QKV projection: one wide, lane-dense matmul with f32 accumulation ----
    qkv = jnp.dot(xn2, wqkv_ref[...],
                  preferred_element_type=jnp.float32)          # (TB*N, 3*inner) f32

    # ---- restructure to per-(head, sequence) batched layout (heads*TB, N, dh), bf16 ----
    # (data movement only; all matmul work stays wide / batched)
    def head_major(col0):
        slabs = []
        for hh in range(heads):
            c = col0 + hh * dim_head
            sl = qkv[:, c:c + dim_head].astype(jnp.bfloat16)   # (TB*N, dh)
            slabs.append(sl.reshape(tb, n, dim_head))          # (TB, N, dh)
        return jnp.concatenate(slabs, axis=0)                  # (heads*TB, N, dh); idx = h*TB + b

    q = head_major(0)                                          # scale already folded into weights
    k = head_major(inner)
    v = head_major(2 * inner)

    bias = jnp.concatenate([bias_ref[...]] * heads, axis=0)    # (heads*TB, 1, N) f32

    # ---- attention core: single leading-batch-dim einsums over heads*TB ----
    s = jnp.einsum('bnd,bmd->bnm', q, k,
                   preferred_element_type=jnp.float32)         # (heads*TB, N, N) f32
    s = s + bias                                               # additive key mask
    s = s - jnp.max(s, axis=-1, keepdims=True)
    p = jnp.exp(s)
    p = p * pl.reciprocal(jnp.sum(p, axis=-1, keepdims=True), approx=True)
    o = jnp.einsum('bnm,bmd->bnd', p.astype(jnp.bfloat16), v,
                   preferred_element_type=jnp.float32)         # (heads*TB, N, dh) f32

    # ---- output projection: rearrange to (TB*N, inner) and do ONE deep-K matmul ----
    o_bf = o.astype(jnp.bfloat16)
    per_head = [o_bf[hh * tb:(hh + 1) * tb].reshape(tbn, dim_head) for hh in range(heads)]
    o_flat = jnp.concatenate(per_head, axis=-1)                # (TB*N, inner), cols = (head, dh)
    out = jnp.dot(o_flat, wout_ref[...],
                  preferred_element_type=jnp.float32)          # (TB*N, D) f32

    # One full lane-dense slab store.
    o_ref[...] = out.reshape(tb, n, d_model).astype(o_ref.dtype)


def invariant_attention(h, mask, gamma, wqkv, wout, *, heads, dim_head,
                        eps=float(jnp.finfo(jnp.float32).eps), batch_tile=None):
    B, N, D = h.shape
    inner = heads * dim_head
    assert wqkv.shape == (D, 3 * inner)
    assert wout.shape == (inner, D)
    assert gamma.shape == (D,)

    # Additive key-mask bias, shaped (B, 1, N) so its block stays layout-friendly.
    if mask is None:
        bias = jnp.zeros((B, 1, N), jnp.float32)
    else:
        assert mask.shape == (B, N)
        bias = jnp.where(mask.astype(bool), 0.0, -1e30).astype(jnp.float32)[:, None, :]

    # Fold dim_head**-0.5 into the q columns of wqkv (done once in XLA); keep original layouts.
    scale = dim_head ** -0.5
    col_scale = jnp.concatenate([jnp.full((inner,), scale, dtype=jnp.float32),
                                 jnp.ones((2 * inner,), dtype=jnp.float32)])
    wqkv_bf = (wqkv.astype(jnp.float32) * col_scale[None, :]).astype(jnp.bfloat16)
    wout_bf = wout.astype(jnp.bfloat16)
    gamma2d = gamma.reshape(1, D).astype(jnp.float32)

    # ---- VMEM-budget-derived batch_tile (keep the grid >= 2 steps for v7x's 2 TCs) ----
    try:
        vmem_cap = int(getattr(pltpu.get_tpu_info(), "vmem_capacity_bytes",
                               64 * 1024 * 1024))
    except Exception:
        vmem_cap = 64 * 1024 * 1024
    budget = int(vmem_cap * 0.6)

    def vmem_estimate(bt):
        tbn = bt * N
        io = (2 * bt * N * D * h.dtype.itemsize       # h block (double-buffered)
              + 2 * bt * N * 4                        # bias block
              + 2 * bt * N * D * h.dtype.itemsize)    # out block
        weights = 2 * (wqkv_bf.size + wout_bf.size) * 2 + 2 * gamma2d.size * 4
        inter = (tbn * D * 4                          # xn f32
                 + tbn * D * 2                        # xn bf16
                 + tbn * 3 * inner * 4                # qkv f32
                 + 3 * heads * bt * N * dim_head * 2  # q/k/v bf16
                 + 2 * heads * bt * N * N * 4         # scores + probs f32
                 + heads * bt * N * N * 2             # probs bf16
                 + heads * bt * N * dim_head * 4      # attn out f32
                 + tbn * inner * 2                    # o_flat bf16
                 + tbn * D * 4)                       # out f32
        return io + weights + inter

    if batch_tile is None:
        divisors = [t for t in range(1, B + 1) if B % t == 0]
        fitting = [t for t in divisors if vmem_estimate(t) <= budget] or [1]
        multi_step = [t for t in fitting if B // t >= 2]
        batch_tile = max(multi_step) if multi_step else max(fitting)
    assert B % batch_tile == 0, "batch_tile must divide B"

    # ~54 MiB on v7x (64 MiB phys), 100 MiB on v5e/v6e (128 MiB phys).
    vmem_limit = int(min(0.85 * vmem_cap, 100 * 1024 * 1024))

    kernel = functools.partial(_invariant_attention_kernel,
                               heads=heads, dim_head=dim_head, eps=eps)

    flops = (2 * B * N * D * 3 * inner               # QKV projection
             + 4 * B * heads * N * N * dim_head      # q k^T and p v
             + 2 * B * N * inner * D)                # output projection
    transcendentals = B * heads * N * N + B * N      # exp + rsqrt
    bytes_accessed = int(2 * B * N * D * h.dtype.itemsize
                         + (wqkv_bf.size + wout_bf.size) * 2
                         + bias.size * 4 + gamma2d.size * 4)

    return pl.pallas_call(
        kernel,
        out_shape=jax.ShapeDtypeStruct((B, N, D), h.dtype),
        grid_spec=pltpu.PrefetchScalarGridSpec(
            num_scalar_prefetch=0,
            grid=(B // batch_tile,),
            in_specs=[
                pl.BlockSpec((batch_tile, N, D), lambda b: (b, 0, 0)),
                pl.BlockSpec((batch_tile, 1, N), lambda b: (b, 0, 0)),
                pl.BlockSpec((1, D), lambda b: (0, 0)),
                pl.BlockSpec((D, 3 * inner), lambda b: (0, 0)),
                pl.BlockSpec((inner, D), lambda b: (0, 0)),
            ],
            out_specs=pl.BlockSpec((batch_tile, N, D), lambda b: (b, 0, 0)),
        ),
        compiler_params=pltpu.CompilerParams(
            dimension_semantics=("parallel",),
            vmem_limit_bytes=vmem_limit),
        cost_estimate=pl.CostEstimate(flops=flops,
                                      transcendentals=transcendentals,
                                      bytes_accessed=bytes_accessed),
    )(h, bias, gamma2d, wqkv_bf, wout_bf)


def _reference(h, mask, gamma, wqkv, wout, *, heads, dim_head, eps):
    # Pure-JAX f32 reference mirroring the PyTorch module semantics.
    B, N, D = h.shape
    inner = heads * dim_head
    x = h.astype(jnp.float32)
    xn = x * jax.lax.rsqrt(jnp.mean(x * x, axis=-1, keepdims=True) + eps) * gamma
    qkv = xn @ wqkv
    q, k, v = jnp.split(qkv, 3, axis=-1)

    def split_heads(t):
        return t.reshape(B, N, heads, dim_head).transpose(0, 2, 1, 3)

    q, k, v = split_heads(q), split_heads(k), split_heads(v)
    s = jnp.einsum('bhnd,bhmd->bhnm', q, k) * dim_head ** -0.5
    if mask is not None:
        s = s + jnp.where(mask, 0.0, -1e30)[:, None, None, :]
    p = jax.nn.softmax(s, axis=-1)
    o = jnp.einsum('bhnm,bhmd->bhnd', p, v)
    o = o.transpose(0, 2, 1, 3).reshape(B, N, inner)
    return o @ wout


if __name__ == "__main__":
    # Small shapes consistent with the module's forward.
    B, N, D = 2, 8, 32
    HEADS, DIM_HEAD = 4, 8          # attn_kwargs: heads=4, dim_head=8
    INNER = HEADS * DIM_HEAD

    key = jax.random.PRNGKey(0)
    k_h, k_qkv, k_out = jax.random.split(key, 3)

    h = jax.random.normal(k_h, (B, N, D), dtype=jnp.float32)
    gamma = jnp.ones((D,), dtype=jnp.float32)             # RMSNorm weight (ones at init)
    wqkv = 0.02 * jax.random.normal(k_qkv, (D, 3 * INNER), dtype=jnp.float32)
    wout = 0.02 * jax.random.normal(k_out, (INNER, D), dtype=jnp.float32)
    # Mask: last two key positions of batch 1 are masked out.
    mask = jnp.ones((B, N), dtype=jnp.bool_).at[1, -2:].set(False)

    out = invariant_attention(h, mask, gamma, wqkv, wout,
                              heads=HEADS, dim_head=DIM_HEAD)
    jax.block_until_ready(out)
    assert out.shape == (B, N, D)

    ref = _reference(h, mask, gamma, wqkv, wout,
                     heads=HEADS, dim_head=DIM_HEAD,
                     eps=float(jnp.finfo(jnp.float32).eps))
    err = float(jnp.max(jnp.abs(out.astype(jnp.float32) - ref)))
    assert err < 5e-3, f"max abs error too large: {err}"
    print("KERNEL_OK")
</pallas_src>

<mosaic_0001>
module attributes {stable_mosaic.version = 11 : i64} {
  func.func @_invariant_attention_kernel(%arg0: i32, %arg1: memref<1x8x32xf32, #tpu.memory_space<vmem>>, %arg2: memref<1x1x8xf32, #tpu.memory_space<vmem>>, %arg3: memref<1x32xf32, #tpu.memory_space<vmem>>, %arg4: memref<32x96xbf16, #tpu.memory_space<vmem>>, %arg5: memref<32x32xbf16, #tpu.memory_space<vmem>>, %arg6: memref<1x8x32xf32, #tpu.memory_space<vmem>>) attributes {dimension_semantics = [#tpu.dimension_semantics<parallel>], iteration_bounds = array<i64: 2>, scalar_prefetch = 0 : i64, scratch_operands = 0 : i64, tpu.core_type = #tpu.core_type<tc>, window_params = [{transform_indices = @transform_0, window_bounds = array<i64: 1, 8, 32>}, {transform_indices = @transform_1, window_bounds = array<i64: 1, 1, 8>}, {pipeline_mode = #tpu.pipeline_mode<synchronous>, transform_indices = @transform_2, window_bounds = array<i64: 1, 32>}, {pipeline_mode = #tpu.pipeline_mode<synchronous>, transform_indices = @transform_3, window_bounds = array<i64: 32, 96>}, {pipeline_mode = #tpu.pipeline_mode<synchronous>, transform_indices = @transform_4, window_bounds = array<i64: 32, 32>}, {transform_indices = @transform_5, window_bounds = array<i64: 1, 8, 32>}]} {
    %c0 = arith.constant 0 : index
    %c0_0 = arith.constant 0 : index
    %c0_1 = arith.constant 0 : index
    %0 = vector.load %arg1[%c0, %c0_0, %c0_1] : memref<1x8x32xf32, #tpu.memory_space<vmem>>, vector<1x8x32xf32>
    %c0_2 = arith.constant 0 : index
    %c0_3 = arith.constant 0 : index
    %1 = vector.load %arg3[%c0_2, %c0_3] : memref<1x32xf32, #tpu.memory_space<vmem>>, vector<1x32xf32>
    %2 = vector.shape_cast %1 : vector<1x32xf32> to vector<32xf32>
    %3 = arith.mulf %0, %0 : vector<1x8x32xf32>
    %cst = arith.constant dense<0.000000e+00> : vector<1x8xf32>
    %4 = vector.multi_reduction <add>, %3, %cst [2] : vector<1x8x32xf32> to vector<1x8xf32>
    %5 = vector.shape_cast %4 : vector<1x8xf32> to vector<1x8x1xf32>
    %cst_4 = arith.constant 3.200000e+01 : f32
    %6 = vector.broadcast %cst_4 : f32 to vector<1x8x1xf32>
    %7 = arith.divf %5, %6 : vector<1x8x1xf32>
    %cst_5 = arith.constant 1.1920929E-7 : f32
    %8 = vector.broadcast %cst_5 : f32 to vector<1x8x1xf32>
    %9 = arith.addf %7, %8 : vector<1x8x1xf32>
    %10 = math.rsqrt %9 : vector<1x8x1xf32>
    %11 = vector.broadcast %10 : vector<1x8x1xf32> to vector<1x8x32xf32>
    %12 = arith.mulf %0, %11 : vector<1x8x32xf32>
    %13 = vector.shape_cast %2 : vector<32xf32> to vector<1x1x32xf32>
    %14 = vector.broadcast %13 : vector<1x1x32xf32> to vector<1x8x32xf32>
    %15 = arith.mulf %12, %14 : vector<1x8x32xf32>
    %16 = vector.shape_cast %15 : vector<1x8x32xf32> to vector<8x32xf32>
    %17 = arith.truncf %16 : vector<8x32xf32> to vector<8x32xbf16>
    %c0_6 = arith.constant 0 : index
    %c0_7 = arith.constant 0 : index
    %18 = vector.load %arg4[%c0_6, %c0_7] : memref<32x96xbf16, #tpu.memory_space<vmem>>, vector<32x96xbf16>
    %cst_8 = arith.constant dense<0.000000e+00> : vector<8x96xf32>
    %19 = tpu.matmul %17, %18, %cst_8 {dimension_numbers = #tpu.dot_dimension_numbers<[1], [0], [0], [1], [0, 0, 1, 1], [], []>} : vector<8x32xbf16>, vector<32x96xbf16>, vector<8x96xf32> -> vector<8x96xf32>
    %20 = vector.extract_strided_slice %19 {offsets = [0, 0], sizes = [8, 8], strides = [1, 1]} : vector<8x96xf32> to vector<8x8xf32>
    %21 = arith.truncf %20 : vector<8x8xf32> to vector<8x8xbf16>
    %22 = vector.shape_cast %21 : vector<8x8xbf16> to vector<1x8x8xbf16>
    %23 = vector.extract_strided_slice %19 {offsets = [0, 8], sizes = [8, 8], strides = [1, 1]} : vector<8x96xf32> to vector<8x8xf32>
    %24 = arith.truncf %23 : vector<8x8xf32> to vector<8x8xbf16>
    %25 = vector.shape_cast %24 : vector<8x8xbf16> to vector<1x8x8xbf16>
    %26 = vector.extract_strided_slice %19 {offsets = [0, 16], sizes = [8, 8], strides = [1, 1]} : vector<8x96xf32> to vector<8x8xf32>
    %27 = arith.truncf %26 : vector<8x8xf32> to vector<8x8xbf16>
    %28 = vector.shape_cast %27 : vector<8x8xbf16> to vector<1x8x8xbf16>
    %29 = vector.extract_strided_slice %19 {offsets = [0, 24], sizes = [8, 8], strides = [1, 1]} : vector<8x96xf32> to vector<8x8xf32>
    %30 = arith.truncf %29 : vector<8x8xf32> to vector<8x8xbf16>
    %31 = vector.shape_cast %30 : vector<8x8xbf16> to vector<1x8x8xbf16>
    %32 = tpu.concatenate %22, %25, %28, %31 in 0 : vector<1x8x8xbf16>, vector<1x8x8xbf16>, vector<1x8x8xbf16>, vector<1x8x8xbf16> -> vector<4x8x8xbf16>
    %33 = vector.extract_strided_slice %19 {offsets = [0, 32], sizes = [8, 8], strides = [1, 1]} : vector<8x96xf32> to vector<8x8xf32>
    %34 = arith.truncf %33 : vector<8x8xf32> to vector<8x8xbf16>
    %35 = vector.shape_cast %34 : vector<8x8xbf16> to vector<1x8x8xbf16>
    %36 = vector.extract_strided_slice %19 {offsets = [0, 40], sizes = [8, 8], strides = [1, 1]} : vector<8x96xf32> to vector<8x8xf32>
    %37 = arith.truncf %36 : vector<8x8xf32> to vector<8x8xbf16>
    %38 = vector.shape_cast %37 : vector<8x8xbf16> to vector<1x8x8xbf16>
    %39 = vector.extract_strided_slice %19 {offsets = [0, 48], sizes = [8, 8], strides = [1, 1]} : vector<8x96xf32> to vector<8x8xf32>
    %40 = arith.truncf %39 : vector<8x8xf32> to vector<8x8xbf16>
    %41 = vector.shape_cast %40 : vector<8x8xbf16> to vector<1x8x8xbf16>
    %42 = vector.extract_strided_slice %19 {offsets = [0, 56], sizes = [8, 8], strides = [1, 1]} : vector<8x96xf32> to vector<8x8xf32>
    %43 = arith.truncf %42 : vector<8x8xf32> to vector<8x8xbf16>
    %44 = vector.shape_cast %43 : vector<8x8xbf16> to vector<1x8x8xbf16>
    %45 = tpu.concatenate %35, %38, %41, %44 in 0 : vector<1x8x8xbf16>, vector<1x8x8xbf16>, vector<1x8x8xbf16>, vector<1x8x8xbf16> -> vector<4x8x8xbf16>
    %46 = vector.extract_strided_slice %19 {offsets = [0, 64], sizes = [8, 8], strides = [1, 1]} : vector<8x96xf32> to vector<8x8xf32>
    %47 = arith.truncf %46 : vector<8x8xf32> to vector<8x8xbf16>
    %48 = vector.shape_cast %47 : vector<8x8xbf16> to vector<1x8x8xbf16>
    %49 = vector.extract_strided_slice %19 {offsets = [0, 72], sizes = [8, 8], strides = [1, 1]} : vector<8x96xf32> to vector<8x8xf32>
    %50 = arith.truncf %49 : vector<8x8xf32> to vector<8x8xbf16>
    %51 = vector.shape_cast %50 : vector<8x8xbf16> to vector<1x8x8xbf16>
    %52 = vector.extract_strided_slice %19 {offsets = [0, 80], sizes = [8, 8], strides = [1, 1]} : vector<8x96xf32> to vector<8x8xf32>
    %53 = arith.truncf %52 : vector<8x8xf32> to vector<8x8xbf16>
    %54 = vector.shape_cast %53 : vector<8x8xbf16> to vector<1x8x8xbf16>
    %55 = vector.extract_strided_slice %19 {offsets = [0, 88], sizes = [8, 8], strides = [1, 1]} : vector<8x96xf32> to vector<8x8xf32>
    %56 = arith.truncf %55 : vector<8x8xf32> to vector<8x8xbf16>
    %57 = vector.shape_cast %56 : vector<8x8xbf16> to vector<1x8x8xbf16>
    %58 = tpu.concatenate %48, %51, %54, %57 in 0 : vector<1x8x8xbf16>, vector<1x8x8xbf16>, vector<1x8x8xbf16>, vector<1x8x8xbf16> -> vector<4x8x8xbf16>
    %c0_9 = arith.constant 0 : index
    %c0_10 = arith.constant 0 : index
    %c0_11 = arith.constant 0 : index
    %59 = vector.load %arg2[%c0_9, %c0_10, %c0_11] : memref<1x1x8xf32, #tpu.memory_space<vmem>>, vector<1x1x8xf32>
    %60 = tpu.concatenate %59, %59, %59, %59 in 0 : vector<1x1x8xf32>, vector<1x1x8xf32>, vector<1x1x8xf32>, vector<1x1x8xf32> -> vector<4x1x8xf32>
    "tpu.trace_start"() <{level = 10 : i32, message = "bnd,bmd->bnm"}> : () -> ()
    %cst_12 = arith.constant dense<0.000000e+00> : vector<4x8x8xf32>
    %61 = tpu.matmul %32, %45, %cst_12 {dimension_numbers = #tpu.dot_dimension_numbers<[2], [2], [1], [1], [0, 0, 0, 1, 1, 1], [0], [0]>} : vector<4x8x8xbf16>, vector<4x8x8xbf16>, vector<4x8x8xf32> -> vector<4x8x8xf32>
    "tpu.trace_stop"() : () -> ()
    %62 = vector.broadcast %60 : vector<4x1x8xf32> to vector<4x8x8xf32>
    %63 = arith.addf %61, %62 : vector<4x8x8xf32>
    %cst_13 = arith.constant dense<0xFF800000> : vector<4x8xf32>
    %64 = vector.multi_reduction <maximumf>, %63, %cst_13 [2] : vector<4x8x8xf32> to vector<4x8xf32>
    %65 = vector.shape_cast %64 : vector<4x8xf32> to vector<4x8x1xf32>
    %66 = vector.broadcast %65 : vector<4x8x1xf32> to vector<4x8x8xf32>
    %67 = arith.subf %63, %66 : vector<4x8x8xf32>
    %68 = math.exp %67 : vector<4x8x8xf32>
    %cst_14 = arith.constant dense<0.000000e+00> : vector<4x8xf32>
    %69 = vector.multi_reduction <add>, %68, %cst_14 [2] : vector<4x8x8xf32> to vector<4x8xf32>
    %70 = vector.shape_cast %69 : vector<4x8xf32> to vector<4x8x1xf32>
    %71 = tpu.reciprocal %70 {approx = true} : vector<4x8x1xf32> -> vector<4x8x1xf32>
    %72 = vector.broadcast %71 : vector<4x8x1xf32> to vector<4x8x8xf32>
    %73 = arith.mulf %68, %72 : vector<4x8x8xf32>
    %74 = arith.truncf %73 : vector<4x8x8xf32> to vector<4x8x8xbf16>
    "tpu.trace_start"() <{level = 10 : i32, message = "bnm,bmd->bnd"}> : () -> ()
    %cst_15 = arith.constant dense<0.000000e+00> : vector<4x8x8xf32>
    %75 = tpu.matmul %74, %58, %cst_15 {dimension_numbers = #tpu.dot_dimension_numbers<[2], [1], [1], [2], [0, 0, 0, 1, 1, 2], [0], [0]>} : vector<4x8x8xbf16>, vector<4x8x8xbf16>, vector<4x8x8xf32> -> vector<4x8x8xf32>
    "tpu.trace_stop"() : () -> ()
    %76 = arith.truncf %75 : vector<4x8x8xf32> to vector<4x8x8xbf16>
    %77 = vector.extract_strided_slice %76 {offsets = [0, 0, 0], sizes = [1, 8, 8], strides = [1, 1, 1]} : vector<4x8x8xbf16> to vector<1x8x8xbf16>
    %78 = vector.shape_cast %77 : vector<1x8x8xbf16> to vector<8x8xbf16>
    %79 = vector.extract_strided_slice %76 {offsets = [1, 0, 0], sizes = [1, 8, 8], strides = [1, 1, 1]} : vector<4x8x8xbf16> to vector<1x8x8xbf16>
    %80 = vector.shape_cast %79 : vector<1x8x8xbf16> to vector<8x8xbf16>
    %81 = vector.extract_strided_slice %76 {offsets = [2, 0, 0], sizes = [1, 8, 8], strides = [1, 1, 1]} : vector<4x8x8xbf16> to vector<1x8x8xbf16>
    %82 = vector.shape_cast %81 : vector<1x8x8xbf16> to vector<8x8xbf16>
    %83 = vector.extract_strided_slice %76 {offsets = [3, 0, 0], sizes = [1, 8, 8], strides = [1, 1, 1]} : vector<4x8x8xbf16> to vector<1x8x8xbf16>
    %84 = vector.shape_cast %83 : vector<1x8x8xbf16> to vector<8x8xbf16>
    %85 = tpu.concatenate %78, %80, %82, %84 in 1 : vector<8x8xbf16>, vector<8x8xbf16>, vector<8x8xbf16>, vector<8x8xbf16> -> vector<8x32xbf16>
    %c0_16 = arith.constant 0 : index
    %c0_17 = arith.constant 0 : index
    %86 = vector.load %arg5[%c0_16, %c0_17] : memref<32x32xbf16, #tpu.memory_space<vmem>>, vector<32x32xbf16>
    %cst_18 = arith.constant dense<0.000000e+00> : vector<8x32xf32>
    %87 = tpu.matmul %85, %86, %cst_18 {dimension_numbers = #tpu.dot_dimension_numbers<[1], [0], [0], [1], [0, 0, 1, 1], [], []>} : vector<8x32xbf16>, vector<32x32xbf16>, vector<8x32xf32> -> vector<8x32xf32>
    %88 = vector.shape_cast %87 : vector<8x32xf32> to vector<1x8x32xf32>
    %c0_19 = arith.constant 0 : index
    %c0_20 = arith.constant 0 : index
    %c0_21 = arith.constant 0 : index
    %89 = vector.load %arg6[%c0_19, %c0_20, %c0_21] : memref<1x8x32xf32, #tpu.memory_space<vmem>>, vector<1x8x32xf32>
    tpu.vector_store %arg6[%c0_19, %c0_20, %c0_21], %88 {strides = array<i32>} : memref<1x8x32xf32, #tpu.memory_space<vmem>>, vector<1x8x32xf32>,
    return
  }
  func.func @transform_0(%arg0: i32) -> (i32, i32, i32) {
    %c0_i32 = arith.constant 0 : i32
    %c0_i32_0 = arith.constant 0 : i32
    %c0_i32_1 = arith.constant 0 : i32
    return %arg0, %c0_i32, %c0_i32_0 : i32, i32, i32
  }
  func.func @transform_1(%arg0: i32) -> (i32, i32, i32) {
    %c0_i32 = arith.constant 0 : i32
    %c0_i32_0 = arith.constant 0 : i32
    %c0_i32_1 = arith.constant 0 : i32
    return %arg0, %c0_i32, %c0_i32_0 : i32, i32, i32
  }
  func.func @transform_2(%arg0: i32) -> (i32, i32) {
    %c0_i32 = arith.constant 0 : i32
    %c0_i32_0 = arith.constant 0 : i32
    %c0_i32_1 = arith.constant 0 : i32
    return %c0_i32, %c0_i32_0 : i32, i32
  }
  func.func @transform_3(%arg0: i32) -> (i32, i32) {
    %c0_i32 = arith.constant 0 : i32
    %c0_i32_0 = arith.constant 0 : i32
    %c0_i32_1 = arith.constant 0 : i32
    return %c0_i32, %c0_i32_0 : i32, i32
  }
  func.func @transform_4(%arg0: i32) -> (i32, i32) {
    %c0_i32 = arith.constant 0 : i32
    %c0_i32_0 = arith.constant 0 : i32
    %c0_i32_1 = arith.constant 0 : i32
    return %c0_i32, %c0_i32_0 : i32, i32
  }
  func.func @transform_5(%arg0: i32) -> (i32, i32, i32) {
    %c0_i32 = arith.constant 0 : i32
    %c0_i32_0 = arith.constant 0 : i32
    %c0_i32_1 = arith.constant 0 : i32
    return %arg0, %c0_i32, %c0_i32_0 : i32, i32, i32
  }
}

</mosaic_0001>

<llo_original>
// kernel: tpu_custom_call.1
$region0: #{tpu_custom_call.1}
  #allocation0 [shape = 'u32[]', space=smem, size = 0x4, offset = 0x4, fixed_abs, tag = 'smem constant byte address 0x4 - core index']
  #allocation1 [shape = 'u32[72,128]{1,0:T(1,128)}', space=vmem, size = 0x9000, scoped, tag = 'internal scratch']
  %s0 = inlined_call_operand.hbm [shape: f32[2,8,32], index: 0, kind: input, shape index: {}]
  %s1 = inlined_call_operand.hbm [shape: f32[2,1,8], index: 1, kind: input, shape index: {}]
  %s2 = inlined_call_operand.vmem [shape: f32[1,32], index: 2, kind: input, shape index: {}]
  %s3 = inlined_call_operand.hbm [shape: bf16[32,96], index: 3, kind: input, shape index: {}]
  %s4 = inlined_call_operand.hbm [shape: bf16[32,32], index: 4, kind: input, shape index: {}]
  %s5 = inlined_call_operand.hbm [shape: f32[2,8,32], index: 5, kind: output, shape index: {}]
  %s6 = sld [smem:[#allocation0]]
  $region69: #{tpu_custom_call.1} parent=0
    _
  %s8 = ssub.s32 1, %s6
  %s9 = scalar_select 0, %s8, %s6
  $region1: #{tpu_custom_call.1} parent=0
    #allocation2 [shape = 'u8[8192]{0}', space=vmem, size = 0x2000, scoped, tag = 'input window, operand 0']
    #allocation3 [shape = 's32[2]{0}', space=sflag, size = 0x8, scoped, tag = 'scoped memory for tpu_custom_call.1']
    #allocation4 [shape = 's32[2]{0}', space=sflag, size = 0x8, scoped, tag = 'scoped memory for tpu_custom_call.1']
    #allocation5 [shape = 'u8[1024]{0}', space=vmem, size = 0x400, scoped, tag = 'input window, operand 1']
    #allocation6 [shape = 's32[2]{0}', space=sflag, size = 0x8, scoped, tag = 'scoped memory for tpu_custom_call.1']
    #allocation7 [shape = 'u8[8192]{0}', space=vmem, size = 0x2000, scoped, tag = 'input window, operand 3, single buffered']
    #allocation8 [shape = 'u8[8192]{0}', space=vmem, size = 0x2000, scoped, tag = 'input window, operand 4, single buffered']
    #allocation9 [shape = 's32[1]{0}', space=sflag, size = 0x4, scoped, tag = 'scoped memory for tpu_custom_call.1']
    #allocation10 [shape = 'u8[8192]{0}', space=vmem, size = 0x2000, scoped, tag = 'output window, operand 0']
    %10 = vsyncpa [#allocation3], 0
    %s11 = scalar_lea.sflag [#allocation3], 1
    %12 = vsyncpa %s11, 0
    %13 = vsyncpa [#allocation6], 0
    %s14 = scalar_lea.sflag [#allocation6], 1
    %15 = vsyncpa %s14, 0
    %16 = vsyncpa [#allocation9], 0
    %17 = vsyncpa [#allocation4], 0
    %s18 = scalar_lea.sflag [#allocation4], 1
    %19 = vsyncpa %s18, 0
    loop: start=0, step=1, limit=4
    $region2: #{tpu_custom_call.1} parent=1 // loop_pre_header
      _
    $region3: #{tpu_custom_call.1} parent=1 // loop_header
      %s21 = sphi 0, %s25
      %p22 = scmp.ge.s32.totalorder %s21, 4
      %s31 = sphi 0, %s33
      %s34 = sphi 0, %s31
      %s35 = sphi 0, %s34
      %s51 = sphi 0, %s35
      %s57 = sphi 0, %s59
      %s60 = sphi 0, %s57
      %s61 = sphi 0, %s60
      %s77 = sphi 0, %s61
      %s81 = sphi 0, %s81
      %s83 = sphi 0, %s81
      %s84 = sphi 0, %s83
      %s98 = sphi 0, %s84
      %s102 = sphi 0, %s102
      %s104 = sphi 0, %s102
      %s105 = sphi 0, %s104
      %s119 = sphi 0, %s105
      %s123 = sphi 0, %s123
      %s125 = sphi 0, %s123
      %s126 = sphi 0, %s125
      %s140 = sphi 0, %s126
      %s146 = sphi 0, %s148
      %s149 = sphi 0, %s146
      %s150 = sphi 0, %s149
      %s166 = sphi 0, %s150
    $region4: #{tpu_custom_call.1} parent=1 // loop_header_branch
      %24 = sbr.rel (%p22) target = $region8
    $region5: #{tpu_custom_call.1} parent=1 // loop_body
      %s26 = ssub.s32 %s21, 1
      %s27 = ssub.s32 %s21, 2
      %s28 = sadd.s32 %s21, 1
      %s29 = ssub.s32 %s21, %s28
      %p30 = scmp.eq.s32.totalorder %s29, 0
      %s32 = sadd.s32 %s31, 1
      %s33 = scalar_select %p30, %s31, %s32
      %p36 = pneg %p30
      %p37 = scmp.eq.s32.totalorder %s21, 1
      %p38 = por %p36, %p37
      %p39 = scmp.ne.s32.totalorder %s31, %s34
      %p40 = scmp.eq.s32.totalorder %s21, 0
      %p41 = por %p39, %p40
      %p42 = scmp.ne.s32.totalorder %s31, %s34
      %p43 = scmp.eq.s32.totalorder %s26, 1
      %p44 = por %p42, %p43
      %p45 = scmp.ne.s32.totalorder %s34, %s35
      %p46 = scmp.eq.s32.totalorder %s26, 0
      %p47 = por %p45, %p46
      %p48 = scmp.ne.s32.totalorder %s34, %s35
      %p49 = scmp.eq.s32.totalorder %s27, 1
      %p50 = por %p48, %p49
      %p52 = scmp.ne.s32.totalorder %s35, %s51
      %p53 = scmp.eq.s32.totalorder %s27, 0
      %p54 = por %p52, %p53
      %s55 = ssub.s32 %s21, %s28
      %p56 = scmp.eq.s32.totalorder %s55, 0
      %s58 = sadd.s32 %s57, 1
      %s59 = scalar_select %p56, %s57, %s58
      %p62 = pneg %p56
      %p63 = scmp.eq.s32.totalorder %s21, 1
      %p64 = por %p62, %p63
      %p65 = scmp.ne.s32.totalorder %s57, %s60
      %p66 = scmp.eq.s32.totalorder %s21, 0
      %p67 = por %p65, %p66
      %p68 = scmp.ne.s32.totalorder %s57, %s60
      %p69 = scmp.eq.s32.totalorder %s26, 1
      %p70 = por %p68, %p69
      %p71 = scmp.ne.s32.totalorder %s60, %s61
      %p72 = scmp.eq.s32.totalorder %s26, 0
      %p73 = por %p71, %p72
      %p74 = scmp.ne.s32.totalorder %s60, %s61
      %p75 = scmp.eq.s32.totalorder %s27, 1
      %p76 = por %p74, %p75
      %p78 = scmp.ne.s32.totalorder %s61, %s77
      %p79 = scmp.eq.s32.totalorder %s27, 0
      %p80 = por %p78, %p79
      %s82 = sadd.s32 %s81, 1
      %p85 = scmp.eq.s32.totalorder %s21, 1
      %p86 = scmp.ne.s32.totalorder %s81, %s83
      %p87 = scmp.eq.s32.totalorder %s21, 0
      %p88 = por %p86, %p87
      %p89 = scmp.ne.s32.totalorder %s81, %s83
      %p90 = scmp.eq.s32.totalorder %s26, 1
      %p91 = por %p89, %p90
      %p92 = scmp.ne.s32.totalorder %s83, %s84
      %p93 = scmp.eq.s32.totalorder %s26, 0
      %p94 = por %p92, %p93
      %p95 = scmp.ne.s32.totalorder %s83, %s84
      %p96 = scmp.eq.s32.totalorder %s27, 1
      %p97 = por %p95, %p96
      %p99 = scmp.ne.s32.totalorder %s84, %s98
      %p100 = scmp.eq.s32.totalorder %s27, 0
      %p101 = por %p99, %p100
      %s103 = sadd.s32 %s102, 1
      %p106 = scmp.eq.s32.totalorder %s21, 1
      %p107 = scmp.ne.s32.totalorder %s102, %s104
      %p108 = scmp.eq.s32.totalorder %s21, 0
      %p109 = por %p107, %p108
      %p110 = scmp.ne.s32.totalorder %s102, %s104
      %p111 = scmp.eq.s32.totalorder %s26, 1
      %p112 = por %p110, %p111
      %p113 = scmp.ne.s32.totalorder %s104, %s105
      %p114 = scmp.eq.s32.totalorder %s26, 0
      %p115 = por %p113, %p114
      %p116 = scmp.ne.s32.totalorder %s104, %s105
      %p117 = scmp.eq.s32.totalorder %s27, 1
      %p118 = por %p116, %p117
      %p120 = scmp.ne.s32.totalorder %s105, %s119
      %p121 = scmp.eq.s32.totalorder %s27, 0
      %p122 = por %p120, %p121
      %s124 = sadd.s32 %s123, 1
      %p127 = scmp.eq.s32.totalorder %s21, 1
      %p128 = scmp.ne.s32.totalorder %s123, %s125
      %p129 = scmp.eq.s32.totalorder %s21, 0
      %p130 = por %p128, %p129
      %p131 = scmp.ne.s32.totalorder %s123, %s125
      %p132 = scmp.eq.s32.totalorder %s26, 1
      %p133 = por %p131, %p132
      %p134 = scmp.ne.s32.totalorder %s125, %s126
      %p135 = scmp.eq.s32.totalorder %s26, 0
      %p136 = por %p134, %p135
      %p137 = scmp.ne.s32.totalorder %s125, %s126
      %p138 = scmp.eq.s32.totalorder %s27, 1
      %p139 = por %p137, %p138
      %p141 = scmp.ne.s32.totalorder %s126, %s140
      %p142 = scmp.eq.s32.totalorder %s27, 0
      %p143 = por %p141, %p142
      %s144 = ssub.s32 %s21, %s28
      %p145 = scmp.eq.s32.totalorder %s144, 0
      %s147 = sadd.s32 %s146, 1
      %s148 = scalar_select %p145, %s146, %s147
      %p151 = pneg %p145
      %p152 = scmp.eq.s32.totalorder %s21, 1
      %p153 = por %p151, %p152
      %p154 = scmp.ne.s32.totalorder %s146, %s149
      %p155 = scmp.eq.s32.totalorder %s21, 0
      %p156 = por %p154, %p155
      %p157 = scmp.ne.s32.totalorder %s146, %s149
      %p158 = scmp.eq.s32.totalorder %s26, 1
      %p159 = por %p157, %p158
      %p160 = scmp.ne.s32.totalorder %s149, %s150
      %p161 = scmp.eq.s32.totalorder %s26, 0
      %p162 = por %p160, %p161
      %p163 = scmp.ne.s32.totalorder %s149, %s150
      %p164 = scmp.eq.s32.totalorder %s27, 1
      %p165 = por %p163, %p164
      %p167 = scmp.ne.s32.totalorder %s150, %s166
      %p168 = scmp.eq.s32.totalorder %s27, 0
      %p169 = por %p167, %p168
      %p170 = scmp.le.s32.totalorder 1, %s21
      %p171 = scmp.lt.s32.totalorder %s21, 3
      %p172 = pnand %p170, %p171
      %p173 = pneg %p172
      // Predicated region
      $region9: #{tpu_custom_call.1} parent=5 // pred_check
        _
      $region10: #{tpu_custom_call.1} parent=5 // pred_check_branch
        %175 = sbr.rel (%p172) target = $region12
      $region11: #{tpu_custom_call.1} parent=5 // pred_region
        %s176 = ssub.s32 %s21, 1
        // Predicated region
        $region13: #{tpu_custom_call.1} parent=11 // pred_check
          %p177 = pneg %p94
        $region14: #{tpu_custom_call.1} parent=11 // pred_check_branch
          %179 = sbr.rel (%p177) target = $region16
        $region15: #{tpu_custom_call.1} parent=11 // pred_region
          _
        $region16: #{tpu_custom_call.1} parent=11 // pred_fallthru
          _
        // Predicated region
        $region17: #{tpu_custom_call.1} parent=11 // pred_check
          %p180 = pneg %p115
        $region18: #{tpu_custom_call.1} parent=11 // pred_check_branch
          %182 = sbr.rel (%p180) target = $region20
        $region19: #{tpu_custom_call.1} parent=11 // pred_region
          %184 = vsyncadd [#allocation6], 0
          %s185 = sshll.u32 %s3, 4
          %s186 = int_to_ptr.hbm [resolvable:$true] %s185
          %s187 = sshll.u32 [#allocation7], 4
          %s188 = int_to_ptr.vmem [resolvable:$true] %s187
          %193 = dma.hbm_to_vmem [thread:$0]  %s186, 256, %s188, [#allocation6], 64, 64, 4
        $region20: #{tpu_custom_call.1} parent=11 // pred_fallthru
          _
        // Predicated region
        $region21: #{tpu_custom_call.1} parent=11 // pred_check
          %p194 = pneg %p136
        $region22: #{tpu_custom_call.1} parent=11 // pred_check_branch
          %196 = sbr.rel (%p194) target = $region24
        $region23: #{tpu_custom_call.1} parent=11 // pred_region
          %198 = vsyncadd [#allocation9], 0
          %s199 = sshll.u32 %s4, 4
          %s200 = int_to_ptr.hbm [resolvable:$true] %s199
          %s201 = sshll.u32 [#allocation8], 4
          %s202 = int_to_ptr.vmem [resolvable:$true] %s201
          %207 = dma.hbm_to_vmem [thread:$0]  %s200, 256, %s202, [#allocation9], 64, 64, 4
        $region24: #{tpu_custom_call.1} parent=11 // pred_fallthru
          _
      $region12: #{tpu_custom_call.1} parent=5 // pred_fallthru
        _
      %p208 = scmp.lt.s32.totalorder %s21, 2
      // Predicated region
      $region25: #{tpu_custom_call.1} parent=5 // pred_check
        %p209 = pneg %p208
      $region26: #{tpu_custom_call.1} parent=5 // pred_check_branch
        %211 = sbr.rel (%p209) target = $region28
      $region27: #{tpu_custom_call.1} parent=5 // pred_region
        // Predicated region
        $region29: #{tpu_custom_call.1} parent=27 // pred_check
          %p212 = pneg %p41
        $region30: #{tpu_custom_call.1} parent=27 // pred_check_branch
          %214 = sbr.rel (%p212) target = $region32
        $region31: #{tpu_custom_call.1} parent=27 // pred_region
          %s215 = sand.u32 %s31, 1
          %s216 = scalar_lea.sflag [#allocation3], %s215
          %s217 = sand.u32 %s31, 1
          %s218 = smul.addr %s217, 8
          %s219 = scalar_lea.vmem [#allocation2], %s218
          %221 = vsyncadd %s216, 0
          %s222 = smul.addr %s21, 8
          %s223 = scalar_lea.hbm %s0, %s222
          %s225 = sshll.u32 %s223, 4
          %s226 = int_to_ptr.hbm [resolvable:$true] %s225
          %s227 = sshll.u32 %s219, 4
          %s228 = int_to_ptr.vmem [resolvable:$true] %s227
          %230 = dma.hbm_to_vmem [thread:$0]  %s226, 128, %s228, %s216
        $region32: #{tpu_custom_call.1} parent=27 // pred_fallthru
          _
        // Predicated region
        $region33: #{tpu_custom_call.1} parent=27 // pred_check
          %p231 = pneg %p67
        $region34: #{tpu_custom_call.1} parent=27 // pred_check_branch
          %233 = sbr.rel (%p231) target = $region36
        $region35: #{tpu_custom_call.1} parent=27 // pred_region
          %s234 = sand.u32 %s21, 1
          %s235 = scalar_lea.sflag [#allocation6], %s234
          %s236 = sand.u32 %s57, 1
          %s237 = scalar_lea.vmem [#allocation5], %s236
          %239 = vsyncadd %s235, 0
          %s240 = scalar_lea.hbm %s1, %s21
          %s242 = sshll.u32 %s240, 4
          %s243 = int_to_ptr.hbm [resolvable:$true] %s242
          %s244 = sshll.u32 %s237, 4
          %s245 = int_to_ptr.vmem [resolvable:$true] %s244
          %247 = dma.hbm_to_vmem [thread:$0]  %s243, 16, %s245, %s235
        $region36: #{tpu_custom_call.1} parent=27 // pred_fallthru
          _
      $region28: #{tpu_custom_call.1} parent=5 // pred_fallthru
        _
      %p248 = scmp.le.s32.totalorder 1, %s21
      %p249 = scmp.lt.s32.totalorder %s21, 3
      %p250 = pnand %p248, %p249
      %p251 = pneg %p250
      // Predicated region
      $region37: #{tpu_custom_call.1} parent=5 // pred_check
        _
      $region38: #{tpu_custom_call.1} parent=5 // pred_check_branch
        %253 = sbr.rel (%p250) target = $region40
      $region39: #{tpu_custom_call.1} parent=5 // pred_region
        %s254 = ssub.s32 %s21, 1
        %s255 = sand.u32 %s34, 1
        %s256 = scalar_lea.sflag [#allocation3], %s255
        %s257 = sand.u32 %s34, 1
        %s258 = smul.addr %s257, 8
        %s259 = scalar_lea.vmem [#allocation2], %s258
        // Predicated region
        $region41: #{tpu_custom_call.1} parent=39 // pred_check
          %p260 = pneg %p47
        $region42: #{tpu_custom_call.1} parent=39 // pred_check_branch
          %262 = sbr.rel (%p260) target = $region44
        $region43: #{tpu_custom_call.1} parent=39 // pred_region
          %264 = dma.done %s256, 128
        $region44: #{tpu_custom_call.1} parent=39 // pred_fallthru
          _
        %s265 = sand.u32 %s26, 1
        %s266 = scalar_lea.sflag [#allocation6], %s265
        %s267 = sand.u32 %s60, 1
        %s268 = scalar_lea.vmem [#allocation5], %s267
        // Predicated region
        $region45: #{tpu_custom_call.1} parent=39 // pred_check
          %p269 = pneg %p73
        $region46: #{tpu_custom_call.1} parent=39 // pred_check_branch
          %271 = sbr.rel (%p269) target = $region48
        $region47: #{tpu_custom_call.1} parent=39 // pred_region
          %273 = dma.done %s266, 16
        $region48: #{tpu_custom_call.1} parent=39 // pred_fallthru
          _
        // Predicated region
        $region49: #{tpu_custom_call.1} parent=39 // pred_check
          %p274 = pneg %p115
        $region50: #{tpu_custom_call.1} parent=39 // pred_check_branch
          %276 = sbr.rel (%p274) target = $region52
        $region51: #{tpu_custom_call.1} parent=39 // pred_region
          %278 = dma.done [#allocation6], 256
        $region52: #{tpu_custom_call.1} parent=39 // pred_fallthru
          _
        // Predicated region
        $region53: #{tpu_custom_call.1} parent=39 // pred_check
          %p279 = pneg %p136
        $region54: #{tpu_custom_call.1} parent=39 // pred_check_branch
          %281 = sbr.rel (%p279) target = $region56
        $region55: #{tpu_custom_call.1} parent=39 // pred_region
          %283 = dma.done [#allocation9], 256
        $region56: #{tpu_custom_call.1} parent=39 // pred_fallthru
          _
        %s284 = sand.u32 %s34, 1
        %s285 = scalar_lea.sflag [#allocation3], %s284
        %s286 = sand.u32 %s34, 1
        %s287 = smul.addr %s286, 8
        %s288 = scalar_lea.vmem [#allocation2], %s287
        %p289 = pneg %p47
        %p290 = pneg %p44
        %s291 = sand.u32 %s26, 1
        %s292 = scalar_lea.sflag [#allocation6], %s291
        %s293 = sand.u32 %s60, 1
        %s294 = scalar_lea.vmem [#allocation5], %s293
        %p295 = pneg %p73
        %p296 = pneg %p70
        %p297 = pneg %p94
        %p298 = pneg %p91
        %p299 = pneg %p115
        %p300 = pneg %p112
        %p301 = pneg %p136
        %p302 = pneg %p133
        %p303 = pneg %p162
        %p304 = pneg %p159
        %s305 = sand.u32 %s149, 1
        %s306 = scalar_lea.sflag [#allocation4], %s305
        %s307 = sand.u32 %s149, 1
        %s308 = smul.addr %s307, 8
        %s309 = scalar_lea.vmem [#allocation10], %s308
        %v311 = vld [vmem:[%s259] sm:$0xff]
        %v312 = vld [vmem:[%s2] sm:$0x1]
        %v313 = vmul.f32 %v311, %v311
        %vm314 = vcmask 261120
        %v315 = vsel %vm314, %v313, 0.0
        %316 = vadd.xlane.f32.xlu0 %v315
        %v317 = vpop.xlane.xlu0 %316
        %v318 = vrcp.pop 32.0
        %v319 = vmul.f32 32.0, %v318
        %v320 = vsub.f32 1.0, %v319
        %v321 = vmul.f32 %v318, %v320
        %v322 = vadd.f32 %v318, %v321
        %vm323 = vweird.f32 %v318
        %v324 = vsel %vm323, %v318, %v322
        %v325 = vmul.f32 %v317, %v324
        %v326 = vadd.f32 %v325, 1.1920929e-07
        %v327 = vrsqrt.pop %v326
        %v328 = vmul.f32 %v327, %v326
        %v329 = vmul.f32 %v328, %v327
        %v330 = vmul.f32 0.5, %v329
        %v331 = vsub.f32 1.5, %v330
        %v332 = vmul.f32 %v327, %v331
        %vm333 = vweird.f32 %v326
        %vm334 = vweird.f32 %v327
        %vm335 = vmor %vm333, %vm334
        %v336 = vsel %vm335, %v327, %v332
        %v337 = vmul.f32 %v311, %v336
        %v339 = vperm.slane %v312, 0
        %v341 = vmul.f32 %v337, %v339
        %v342 = vpack.c.bf16 %v341, %v341
        %v343 = vld [vmem:[#allocation7] sm:$0xf]
        %v344 = vld [vmem:[#allocation7 + $0x4] sm:$0xf]
        %v345 = vld [vmem:[#allocation7 + $0x8] sm:$0xf]
        %v346 = vld [vmem:[#allocation7 + $0xc] sm:$0xf]
        %v351 = vunpack.c.l.b16 %v343
        %v352 = vunpack.c.l.b16 %v344
        %v353 = vunpack.c.l.b16 %v345
        %v354 = vunpack.c.l.b16 %v346
        %v355 = vpack.c.b16 %v352, %v351
        %v356 = vpack.c.b16 %v354, %v353
        %v360 = vsel %vm314, %v342, 0
        %362 = vmatpush.bf16.msra.mxu0 0
        %363 = vmatpush.bf16.msra.mxu0 0
        %364 = vmatpush.bf16.msra.mxu0 0
        %365 = vmatpush.bf16.msra.mxu0 0
        %366 = vmatpush.bf16.msra.mxu0 0
        %367 = vmatpush.bf16.msra.mxu0 0
        %368 = vmatpush.bf16.msra.mxu0 %v356
        %369 = vmatpush.bf16.msra.mxu0 %v355
        %370 = vmatmul.bf16.gmra.mxu0 %v360
        %v371 = vpop.f32.mrf.mxu0
        %v372 = vadd.f32 0.0, %v371
        %v373 = vpop.f32.mrf.mxu0
        %374 = vdwg.mxu0
        %v375 = vpack.c.bf16 %v372, %v372
        %377 = vrot.lane.b32.xlu0 %v375, 120
        %v378 = vpop.permute.xlu0 %377
        %379 = vrot.lane.b32.xlu0 %v375, 112
        %v380 = vpop.permute.xlu0 %379
        %381 = vrot.lane.b32.xlu0 %v375, 104
        %v382 = vpop.permute.xlu0 %381
        %v383 = vld [vmem:[%s268] sm:$0x1]
        %v385 = vperm.slane %v383, 0
        %v387 = vunpack.c.l.b16 %v375
        %v388 = vpack.c.b16 %v387, %v387
        %389 = vrot.lane.b32.xlu0 %v388, 96
        %v390 = vpop.permute.xlu0 %389
        %vm391 = vcmask 64512
        %v393 = vsel %vm391, %v375, 0
        %v396 = vsel %vm391, %v390, 0
        %398 = vmatpush.bf16.xpose.msra.mxu0 0
        %399 = vmatpush.bf16.xpose.msra.mxu0 0
        %400 = vmatpush.bf16.xpose.msra.mxu0 0
        %401 = vmatpush.bf16.xpose.msra.mxu0 0
        %402 = vmatpush.bf16.xpose.msra.mxu0 0
        %403 = vmatpush.bf16.xpose.msra.mxu0 0
        %404 = vmatpush.bf16.xpose.msra.mxu0 0
        %405 = vmatpush.bf16.xpose.msra.mxu0 %v396
        %406 = vmatmul.bf16.gmra.mxu0 %v393
        %v407 = vpop.f32.mrf.mxu0
        %v408 = vadd.f32 %v385, %v407
        %v409 = vpop.f32.mrf.mxu0
        %410 = vdwg.mxu0
        %v411 = vunpack.c.l.b16 %v378
        %v412 = vpack.c.b16 %v411, %v411
        %413 = vrot.lane.b32.xlu0 %v412, 96
        %v414 = vpop.permute.xlu0 %413
        %v416 = vsel %vm391, %v378, 0
        %v419 = vsel %vm391, %v414, 0
        %421 = vmatpush.bf16.xpose.msra.mxu0 0
        %422 = vmatpush.bf16.xpose.msra.mxu0 0
        %423 = vmatpush.bf16.xpose.msra.mxu0 0
        %424 = vmatpush.bf16.xpose.msra.mxu0 0
        %425 = vmatpush.bf16.xpose.msra.mxu0 0
        %426 = vmatpush.bf16.xpose.msra.mxu0 0
        %427 = vmatpush.bf16.xpose.msra.mxu0 0
        %428 = vmatpush.bf16.xpose.msra.mxu0 %v419
        %429 = vmatmul.bf16.gmra.mxu0 %v416
        %v430 = vpop.f32.mrf.mxu0
        %v431 = vadd.f32 %v385, %v430
        %v432 = vpop.f32.mrf.mxu0
        %433 = vdwg.mxu0
        %v434 = vunpack.c.l.b16 %v380
        %v435 = vpack.c.b16 %v434, %v434
        %436 = vrot.lane.b32.xlu0 %v435, 96
        %v437 = vpop.permute.xlu0 %436
        %v439 = vsel %vm391, %v380, 0
        %v442 = vsel %vm391, %v437, 0
        %444 = vmatpush.bf16.xpose.msra.mxu0 0
        %445 = vmatpush.bf16.xpose.msra.mxu0 0
        %446 = vmatpush.bf16.xpose.msra.mxu0 0
        %447 = vmatpush.bf16.xpose.msra.mxu0 0
        %448 = vmatpush.bf16.xpose.msra.mxu0 0
        %449 = vmatpush.bf16.xpose.msra.mxu0 0
        %450 = vmatpush.bf16.xpose.msra.mxu0 0
        %451 = vmatpush.bf16.xpose.msra.mxu0 %v442
        %452 = vmatmul.bf16.gmra.mxu0 %v439
        %v453 = vpop.f32.mrf.mxu0
        %v454 = vadd.f32 %v385, %v453
        %v455 = vpop.f32.mrf.mxu0
        %456 = vdwg.mxu0
        %v457 = vunpack.c.l.b16 %v382
        %v458 = vpack.c.b16 %v457, %v457
        %459 = vrot.lane.b32.xlu0 %v458, 96
        %v460 = vpop.permute.xlu0 %459
        %v462 = vsel %vm391, %v382, 0
        %v465 = vsel %vm391, %v460, 0
        %467 = vmatpush.bf16.xpose.msra.mxu0 0
        %468 = vmatpush.bf16.xpose.msra.mxu0 0
        %469 = vmatpush.bf16.xpose.msra.mxu0 0
        %470 = vmatpush.bf16.xpose.msra.mxu0 0
        %471 = vmatpush.bf16.xpose.msra.mxu0 0
        %472 = vmatpush.bf16.xpose.msra.mxu0 0
        %473 = vmatpush.bf16.xpose.msra.mxu0 0
        %474 = vmatpush.bf16.xpose.msra.mxu0 %v465
        %475 = vmatmul.bf16.gmra.mxu0 %v462
        %v476 = vpop.f32.mrf.mxu0
        %v477 = vadd.f32 %v385, %v476
        %v478 = vpop.f32.mrf.mxu0
        %479 = vdwg.mxu0
        %v480 = vsel %vm391, %v408, -inf
        %481 = vmax.xlane.f32.xlu0 %v480
        %v482 = vpop.xlane.xlu0 %481
        %v483 = vsel %vm391, %v431, -inf
        %484 = vmax.xlane.f32.xlu0 %v483
        %v485 = vpop.xlane.xlu0 %484
        %v486 = vsel %vm391, %v454, -inf
        %487 = vmax.xlane.f32.xlu0 %v486
        %v488 = vpop.xlane.xlu0 %487
        %v489 = vsel %vm391, %v477, -inf
        %490 = vmax.xlane.f32.xlu0 %v489
        %v491 = vpop.xlane.xlu0 %490
        %v492 = vsub.f32 %v408, %v482
        %v493 = vsub.f32 %v431, %v485
        %v494 = vsub.f32 %v454, %v488
        %v495 = vsub.f32 %v477, %v491
        %v496 = vmul.f32 %v492, 1.442695
        %v497 = vpow.pop %v496
        %v498 = vmul.f32 %v493, 1.442695
        %v499 = vpow.pop %v498
        %v500 = vmul.f32 %v494, 1.442695
        %v501 = vpow.pop %v500
        %v502 = vmul.f32 %v495, 1.442695
        %v503 = vpow.pop %v502
        %v504 = vsel %vm391, %v497, 0.0
        %505 = vadd.xlane.f32.xlu0 %v504
        %v506 = vpop.xlane.xlu0 %505
        %v507 = vsel %vm391, %v499, 0.0
        %508 = vadd.xlane.f32.xlu0 %v507
        %v509 = vpop.xlane.xlu0 %508
        %v510 = vsel %vm391, %v501, 0.0
        %511 = vadd.xlane.f32.xlu0 %v510
        %v512 = vpop.xlane.xlu0 %511
        %v513 = vsel %vm391, %v503, 0.0
        %514 = vadd.xlane.f32.xlu0 %v513
        %v515 = vpop.xlane.xlu0 %514
        %v516 = vrcp.pop %v506
        %v517 = vrcp.pop %v509
        %v518 = vrcp.pop %v512
        %v519 = vrcp.pop %v515
        %v520 = vmul.f32 %v497, %v516
        %v521 = vmul.f32 %v499, %v517
        %v522 = vmul.f32 %v501, %v518
        %v523 = vmul.f32 %v503, %v519
        %v524 = vpack.c.bf16 %v520, %v520
        %v525 = vpack.c.bf16 %v521, %v521
        %v526 = vpack.c.bf16 %v522, %v522
        %v527 = vpack.c.bf16 %v523, %v523
        %528 = vrot.lane.b32.xlu0 %v388, 64
        %v529 = vpop.permute.xlu0 %528
        %v531 = vsel %vm391, %v524, 0
        %vm533 = vcmask 1043456
        %v535 = vsel %vm533, %v529, 0
        %537 = vmatpush.bf16.msra.mxu0 0
        %538 = vmatpush.bf16.msra.mxu0 0
        %539 = vmatpush.bf16.msra.mxu0 0
        %540 = vmatpush.bf16.msra.mxu0 0
        %541 = vmatpush.bf16.msra.mxu0 0
        %542 = vmatpush.bf16.msra.mxu0 0
        %543 = vmatpush.bf16.msra.mxu0 0
        %544 = vmatpush.bf16.msra.mxu0 %v535
        %545 = vmatmul.bf16.gmra.mxu0 %v531
        %v546 = vpop.f32.mrf.mxu0
        %v547 = vadd.f32 0.0, %v546
        %v548 = vpop.f32.mrf.mxu0
        %549 = vdwg.mxu0
        %550 = vrot.lane.b32.xlu0 %v412, 64
        %v551 = vpop.permute.xlu0 %550
        %v553 = vsel %vm391, %v525, 0
        %v556 = vsel %vm533, %v551, 0
        %558 = vmatpush.bf16.msra.mxu0 0
        %559 = vmatpush.bf16.msra.mxu0 0
        %560 = vmatpush.bf16.msra.mxu0 0
        %561 = vmatpush.bf16.msra.mxu0 0
        %562 = vmatpush.bf16.msra.mxu0 0
        %563 = vmatpush.bf16.msra.mxu0 0
        %564 = vmatpush.bf16.msra.mxu0 0
        %565 = vmatpush.bf16.msra.mxu0 %v556
        %566 = vmatmul.bf16.gmra.mxu0 %v553
        %v567 = vpop.f32.mrf.mxu0
        %v568 = vadd.f32 0.0, %v567
        %v569 = vpop.f32.mrf.mxu0
        %570 = vdwg.mxu0
        %571 = vrot.lane.b32.xlu0 %v435, 64
        %v572 = vpop.permute.xlu0 %571
        %v574 = vsel %vm391, %v526, 0
        %v577 = vsel %vm533, %v572, 0
        %579 = vmatpush.bf16.msra.mxu0 0
        %580 = vmatpush.bf16.msra.mxu0 0
        %581 = vmatpush.bf16.msra.mxu0 0
        %582 = vmatpush.bf16.msra.mxu0 0
        %583 = vmatpush.bf16.msra.mxu0 0
        %584 = vmatpush.bf16.msra.mxu0 0
        %585 = vmatpush.bf16.msra.mxu0 0
        %586 = vmatpush.bf16.msra.mxu0 %v577
        %587 = vmatmul.bf16.gmra.mxu0 %v574
        %v588 = vpop.f32.mrf.mxu0
        %v589 = vadd.f32 0.0, %v588
        %v590 = vpop.f32.mrf.mxu0
        %591 = vdwg.mxu0
        %592 = vrot.lane.b32.xlu0 %v458, 64
        %v593 = vpop.permute.xlu0 %592
        %v595 = vsel %vm391, %v527, 0
        %v598 = vsel %vm533, %v593, 0
        %600 = vmatpush.bf16.msra.mxu0 0
        %601 = vmatpush.bf16.msra.mxu0 0
        %602 = vmatpush.bf16.msra.mxu0 0
        %603 = vmatpush.bf16.msra.mxu0 0
        %604 = vmatpush.bf16.msra.mxu0 0
        %605 = vmatpush.bf16.msra.mxu0 0
        %606 = vmatpush.bf16.msra.mxu0 0
        %607 = vmatpush.bf16.msra.mxu0 %v598
        %608 = vmatmul.bf16.gmra.mxu0 %v595
        %v609 = vpop.f32.mrf.mxu0
        %v610 = vadd.f32 0.0, %v609
        %v611 = vpop.f32.mrf.mxu0
        %612 = vdwg.mxu0
        %v613 = vpack.c.bf16 %v547, %v547
        %v614 = vpack.c.bf16 %v568, %v568
        %v615 = vpack.c.bf16 %v589, %v589
        %v616 = vpack.c.bf16 %v610, %v610
        %v618 = vunpack.c.l.b16 %v614
        %v619 = vpack.c.b16 %v618, %v618
        %620 = vrot.lane.b32.xlu0 %v619, 8
        %v621 = vpop.permute.xlu0 %620
        %v623 = vunpack.c.l.b16 %v615
        %v624 = vpack.c.b16 %v623, %v623
        %625 = vrot.lane.b32.xlu0 %v624, 16
        %v626 = vpop.permute.xlu0 %625
        %v628 = vunpack.c.l.b16 %v616
        %v629 = vpack.c.b16 %v628, %v628
        %630 = vrot.lane.b32.xlu0 %v629, 24
        %v631 = vpop.permute.xlu0 %630
        %v634 = vsel %vm391, %v613, %v621
        %vm635 = vcmask 130048
        %v637 = vsel %vm635, %v634, %v626
        %vm638 = vcmask 195584
        %v640 = vsel %vm638, %v637, %v631
        %v641 = vld [vmem:[#allocation8] sm:$0xf]
        %v642 = vld [vmem:[#allocation8 + $0x4] sm:$0xf]
        %v643 = vld [vmem:[#allocation8 + $0x8] sm:$0xf]
        %v644 = vld [vmem:[#allocation8 + $0xc] sm:$0xf]
        %v649 = vunpack.c.l.b16 %v641
        %v650 = vunpack.c.l.b16 %v642
        %v651 = vunpack.c.l.b16 %v643
        %v652 = vunpack.c.l.b16 %v644
        %v653 = vpack.c.b16 %v650, %v649
        %v654 = vpack.c.b16 %v652, %v651
        %v657 = vsel %vm314, %v640, 0
        %659 = vmatpush.bf16.msra.mxu0 0
        %660 = vmatpush.bf16.msra.mxu0 0
        %661 = vmatpush.bf16.msra.mxu0 0
        %662 = vmatpush.bf16.msra.mxu0 0
        %663 = vmatpush.bf16.msra.mxu0 0
        %664 = vmatpush.bf16.msra.mxu0 0
        %665 = vmatpush.bf16.msra.mxu0 %v654
        %666 = vmatpush.bf16.msra.mxu0 %v653
        %667 = vmatmul.bf16.gmra.mxu0 %v657
        %v668 = vpop.f32.mrf.mxu0
        %v669 = vadd.f32 0.0, %v668
        %v670 = vpop.f32.mrf.mxu0
        %671 = vdwg.mxu0
        %672 = vst.msk [vmem:[%s309] sm:$0xff] %vm314, %v669
        %s673 = sand.u32 %s149, 1
        %s674 = scalar_lea.sflag [#allocation4], %s673
        %s675 = sand.u32 %s149, 1
        %s676 = smul.addr %s675, 8
        %s677 = scalar_lea.vmem [#allocation10], %s676
        // Predicated region
        $region57: #{tpu_custom_call.1} parent=39 // pred_check
          %p678 = pneg %p159
        $region58: #{tpu_custom_call.1} parent=39 // pred_check_branch
          %680 = sbr.rel (%p678) target = $region60
        $region59: #{tpu_custom_call.1} parent=39 // pred_region
          %682 = vsyncadd %s674, 0
          %s683 = smul.addr %s26, 8
          %s684 = scalar_lea.hbm %s5, %s683
          %s686 = sshll.u32 %s677, 4
          %s687 = int_to_ptr.vmem [resolvable:$true] %s686
          %s688 = sshll.u32 %s684, 4
          %s689 = int_to_ptr.hbm [resolvable:$true] %s688
          %691 = dma.vmem_to_hbm [thread:$0]  %s687, 128, %s689, %s674
        $region60: #{tpu_custom_call.1} parent=39 // pred_fallthru
          _
      $region40: #{tpu_custom_call.1} parent=5 // pred_fallthru
        _
      %p692 = scmp.le.s32.totalorder 2, %s21
      // Predicated region
      $region61: #{tpu_custom_call.1} parent=5 // pred_check
        %p693 = pneg %p692
      $region62: #{tpu_custom_call.1} parent=5 // pred_check_branch
        %695 = sbr.rel (%p693) target = $region64
      $region63: #{tpu_custom_call.1} parent=5 // pred_region
        %s696 = ssub.s32 %s21, 2
        // Predicated region
        $region65: #{tpu_custom_call.1} parent=63 // pred_check
          %p697 = pneg %p165
        $region66: #{tpu_custom_call.1} parent=63 // pred_check_branch
          %699 = sbr.rel (%p697) target = $region68
        $region67: #{tpu_custom_call.1} parent=63 // pred_region
          %s700 = sand.u32 %s150, 1
          %s701 = scalar_lea.sflag [#allocation4], %s700
          %s702 = sand.u32 %s150, 1
          %s703 = smul.addr %s702, 8
          %s704 = scalar_lea.vmem [#allocation10], %s703
          %706 = dma.done %s701, 128
        $region68: #{tpu_custom_call.1} parent=63 // pred_fallthru
          _
      $region64: #{tpu_custom_call.1} parent=5 // pred_fallthru
        _
    $region6: #{tpu_custom_call.1} parent=1 // loop_footer
      %s25 = sadd.s32 1, %s21
    $region7: #{tpu_custom_call.1} parent=1 // loop_footer_branch
      %20 = sbr.rel target = $region3
    $region8: #{tpu_custom_call.1} parent=1 // loop_exit
      _
    %707 = vsyncpa [#allocation3], 1
    %s708 = scalar_lea.sflag [#allocation3], 1
    %709 = vsyncpa %s708, 1
    %710 = vsyncpa [#allocation6], 1
    %s711 = scalar_lea.sflag [#allocation6], 1
    %712 = vsyncpa %s711, 1
    %713 = vsyncpa [#allocation9], 1
    %714 = vsyncpa [#allocation4], 1
    %s715 = scalar_lea.sflag [#allocation4], 1
    %716 = vsyncpa %s715, 1

</llo_original>
